<compile_context>
chip_gen: v7x
topology: tpu7x:2x2x1
jax: 0.10.0
libtpu: 0.0.40
codegen_flags: <defaults>
</compile_context>

<pallas_src>
import functools

import jax
import jax.numpy as jnp
import numpy as np
from jax import lax
from jax.experimental import pallas as pl
from jax.experimental.pallas import tpu as pltpu

NEG_SLOPE = 0.1


def _down_kernel(x_ref, w1_ref, b1_ref, w2_ref, b2_ref, o_ref, *, K):
    # x_ref : (NB, 2, 2, H2, W2*Cin)   pool window on dims 1,2; Cin in lanes
    # w1_ref: (K*W2*Cin,  W2*Cout)     bf16 banded (w2-folded) conv1 weight
    # b1_ref: (1, W2*Cout)             f32 bias tiled over w2
    # w2_ref: (K*W2*Cout, W2*Cout)     bf16 banded conv2 weight
    # b2_ref: (1, W2*Cout)             f32
    # o_ref : (NB*H2, W2*Cout)         lane-dense output slab
    NB, _, _, H2, _ = x_ref.shape
    P = (K - 1) // 2
    R = NB * H2                                   # matmul M dim (rows = (n, h2))

    # ---- 2x2 average pool: window already on major dims -> 3 adds, 1 mul ----
    pooled = (x_ref[:, 0, 0].astype(jnp.float32) +
              x_ref[:, 0, 1].astype(jnp.float32) +
              x_ref[:, 1, 0].astype(jnp.float32) +
              x_ref[:, 1, 1].astype(jnp.float32)) * 0.25      # (NB, H2, W2*Cin)
    pooled = pooled.reshape(R, pooled.shape[-1])              # free: major dims

    # Row (h2) positions, shared by both convs (hoisted out of the tap loops).
    h_idx = lax.broadcasted_iota(jnp.int32, (R, 1), 0)
    h2_pos = h_idx % H2 if NB > 1 else h_idx

    def row_taps(img):
        # img: (R, L) f32 with rows = (n, h2), lanes = (w2, c).
        # Returns (R, K*L) bf16: the K h-shifted copies (zero above/below the
        # image), built fully in registers -- one sublane roll + one masked
        # select per tap, then ONE lane concatenate.  The W-direction taps and
        # W zero-padding live in the banded weight matrix, so no lane rolls,
        # no W masks and no per-tap VMEM stores are needed.
        taps = []
        for kh in range(K):
            dy = kh - P
            sh = img if dy == 0 else pltpu.roll(img, shift=(-dy) % R, axis=0)
            ok_h = (h2_pos >= -dy) & (h2_pos < H2 - dy)       # (R, 1) bool
            taps.append(jnp.where(ok_h, sh, 0.0))
        return jnp.concatenate(taps, axis=-1).astype(jnp.bfloat16)

    def conv_lrelu(patch_bf16, w_ref, b_ref):
        acc = jnp.dot(patch_bf16, w_ref[...],
                      preferred_element_type=jnp.float32)     # (R, W2*Cout) f32
        acc = acc + b_ref[...]
        return jnp.where(acc > 0, acc, NEG_SLOPE * acc)

    # conv1 + lrelu; the result is already in the folded (R, W2*Cout) layout,
    # so conv2's taps are built on it directly (no relayout between convs).
    act1 = conv_lrelu(row_taps(pooled), w1_ref, b1_ref)
    act2 = conv_lrelu(row_taps(act1), w2_ref, b2_ref)

    # Single lane-dense (unmasked) output store: 128 lanes in the demo config.
    o_ref[...] = act2.astype(o_ref.dtype)


def down_forward(x_nchw, w1_hwio, b1, w2_hwio, b2):
    """Pallas implementation of down.forward.  x is NCHW (PyTorch layout)."""
    N, Cin, H, W = x_nchw.shape
    K, _, _, Cout = w1_hwio.shape
    assert H % 2 == 0 and W % 2 == 0
    H2, W2 = H // 2, W // 2

    # Images folded per grid step (NB).  Keep >= 2 grid steps whenever N >= 2
    # so the "parallel" axis is sharded across v7x's two TensorCores, and cap
    # the per-step row count so live state stays small on every generation.
    NB = 1
    for d in range(2, N + 1):
        if N % d == 0 and N // d >= 2 and d * H2 <= 256:
            NB = d
    assert (NB * H2) % 8 == 0 or N // NB == 1, (
        "per-step row count must tile the 8-sublane dim")
    # TODO(synk): generalize the row tiling for H2 not a multiple of 8.

    # One fused layout copy: NCHW -> (N, 2, 2, H2, W2*Cin); pool window on
    # major dims, Cin folded into the lane dim.
    x = (x_nchw.reshape(N, Cin, H2, 2, W2, 2)
               .transpose(0, 3, 5, 2, 4, 1)
               .reshape(N, 2, 2, H2, W2 * Cin))

    # Banded (block-Toeplitz over w2) im2col weights, bf16:
    #   W_big[(kh*W2 + w2)*C + c, v*Cout + co] = w[kh, w2 - v + P, c, co]
    # (zero when w2 - v + P is outside [0, K)), so the MXU matmul applies the
    # W-direction taps and the W zero-padding and emits the lane-dense slab.
    P = (K - 1) // 2

    def fold_weight(w_hwio):
        Kh, Kw, Ci, Co = w_hwio.shape
        w2i = jnp.arange(W2)[:, None, None]
        vi = jnp.arange(W2)[None, :, None]
        kwi = jnp.arange(Kw)[None, None, :]
        band = (kwi == (w2i - vi + P)).astype(w_hwio.dtype)    # (W2, W2, Kw)
        w_big = jnp.einsum('wvk,hkcf->hwcvf', band, w_hwio)    # (Kh,W2,Ci,W2,Co)
        return w_big.reshape(Kh * W2 * Ci, W2 * Co).astype(jnp.bfloat16)

    w1_big = fold_weight(w1_hwio)                              # (K*W2*Cin,  W2*Cout)
    w2_big = fold_weight(w2_hwio)                              # (K*W2*Cout, W2*Cout)
    b1_big = jnp.tile(b1.astype(jnp.float32), W2).reshape(1, W2 * Cout)
    b2_big = jnp.tile(b2.astype(jnp.float32), W2).reshape(1, W2 * Cout)

    kernel = functools.partial(_down_kernel, K=K)

    out_folded = pl.pallas_call(
        kernel,
        out_shape=jax.ShapeDtypeStruct((N * H2, W2 * Cout), x_nchw.dtype),
        grid_spec=pltpu.PrefetchScalarGridSpec(
            num_scalar_prefetch=0,
            grid=(N // NB,),
            in_specs=[
                pl.BlockSpec((NB, 2, 2, H2, W2 * Cin),
                             lambda b: (b, 0, 0, 0, 0)),
                pl.BlockSpec((K * W2 * Cin, W2 * Cout), lambda b: (0, 0)),
                pl.BlockSpec((1, W2 * Cout), lambda b: (0, 0)),
                pl.BlockSpec((K * W2 * Cout, W2 * Cout), lambda b: (0, 0)),
                pl.BlockSpec((1, W2 * Cout), lambda b: (0, 0)),
            ],
            out_specs=pl.BlockSpec((NB * H2, W2 * Cout), lambda b: (b, 0)),
        ),
        compiler_params=pltpu.CompilerParams(
            dimension_semantics=("parallel",),
            vmem_limit_bytes=32 * 1024 * 1024),
    )(x, w1_big, b1_big, w2_big, b2_big)

    # Folded (N*H2, W2*Cout) slab -> PyTorch NCHW.
    return out_folded.reshape(N, H2, W2, Cout).transpose(0, 3, 1, 2)


def down_reference(x_nchw, w1_hwio, b1, w2_hwio, b2):
    """Plain-JAX reference matching F.avg_pool2d + Conv2d + leaky_relu(0.1)."""
    N, Cin, H, W = x_nchw.shape
    K = w1_hwio.shape[0]
    P = (K - 1) // 2
    pooled = x_nchw.reshape(N, Cin, H // 2, 2, W // 2, 2).mean(axis=(3, 5))

    def conv(x, w_hwio, b):
        w_oihw = jnp.transpose(w_hwio, (3, 2, 0, 1))   # HWIO -> torch OIHW
        y = lax.conv_general_dilated(
            x, w_oihw, window_strides=(1, 1), padding=((P, P), (P, P)),
            dimension_numbers=('NCHW', 'OIHW', 'NCHW'))
        return y + b.reshape(1, -1, 1, 1)

    def lrelu(v):
        return jnp.where(v > 0, v, NEG_SLOPE * v)

    y = lrelu(conv(pooled, w1_hwio, b1))
    y = lrelu(conv(y, w2_hwio, b2))
    return y


if __name__ == "__main__":
    # module config: down(inChannels=4, outChannels=16, filterSize=3)
    N, Cin, H, W = 2, 4, 16, 16
    Cout, K = 16, 3

    key = jax.random.PRNGKey(0)
    kx, k1, kb1, k2, kb2 = jax.random.split(key, 5)
    x = jax.random.normal(kx, (N, Cin, H, W), jnp.float32)
    # deterministic synthetic parameters (HWIO == torch (O,I,K,K) transposed)
    w1 = jax.random.normal(k1, (K, K, Cin, Cout), jnp.float32) * 0.1
    b1 = jax.random.normal(kb1, (Cout,), jnp.float32) * 0.1
    w2 = jax.random.normal(k2, (K, K, Cout, Cout), jnp.float32) * 0.1
    b2 = jax.random.normal(kb2, (Cout,), jnp.float32) * 0.1

    out = jax.jit(down_forward)(x, w1, b1, w2, b2)
    out = jax.block_until_ready(out)

    ref = down_reference(x, w1, b1, w2, b2)
    # bf16 patches/weights on the MXU (f32 accumulation): relaxed tolerance.
    np.testing.assert_allclose(np.asarray(out), np.asarray(ref),
                               rtol=2e-2, atol=2e-2)
    print("KERNEL_OK")
</pallas_src>

<mosaic_0001>
module attributes {stable_mosaic.version = 11 : i64} {
  func.func @_down_kernel(%arg0: i32, %arg1: memref<1x2x2x8x32xf32, #tpu.memory_space<vmem>>, %arg2: memref<96x128xbf16, #tpu.memory_space<vmem>>, %arg3: memref<1x128xf32, #tpu.memory_space<vmem>>, %arg4: memref<384x128xbf16, #tpu.memory_space<vmem>>, %arg5: memref<1x128xf32, #tpu.memory_space<vmem>>, %arg6: memref<8x128xf32, #tpu.memory_space<vmem>>) attributes {dimension_semantics = [#tpu.dimension_semantics<parallel>], iteration_bounds = array<i64: 2>, scalar_prefetch = 0 : i64, scratch_operands = 0 : i64, tpu.core_type = #tpu.core_type<tc>, window_params = [{transform_indices = @transform_0, window_bounds = array<i64: 1, 2, 2, 8, 32>}, {pipeline_mode = #tpu.pipeline_mode<synchronous>, transform_indices = @transform_1, window_bounds = array<i64: 96, 128>}, {pipeline_mode = #tpu.pipeline_mode<synchronous>, transform_indices = @transform_2, window_bounds = array<i64: 1, 128>}, {pipeline_mode = #tpu.pipeline_mode<synchronous>, transform_indices = @transform_3, window_bounds = array<i64: 384, 128>}, {pipeline_mode = #tpu.pipeline_mode<synchronous>, transform_indices = @transform_4, window_bounds = array<i64: 1, 128>}, {transform_indices = @transform_5, window_bounds = array<i64: 8, 128>}]} {
    %c0 = arith.constant 0 : index
    %c0_0 = arith.constant 0 : index
    %c0_1 = arith.constant 0 : index
    %c0_2 = arith.constant 0 : index
    %c0_3 = arith.constant 0 : index
    %0 = vector.load %arg1[%c0, %c0_0, %c0_1, %c0_2, %c0_3] : memref<1x2x2x8x32xf32, #tpu.memory_space<vmem>>, vector<1x1x1x8x32xf32>
    %1 = vector.shape_cast %0 : vector<1x1x1x8x32xf32> to vector<1x8x32xf32>
    %c0_4 = arith.constant 0 : index
    %c0_5 = arith.constant 0 : index
    %c1 = arith.constant 1 : index
    %c0_6 = arith.constant 0 : index
    %c0_7 = arith.constant 0 : index
    %2 = vector.load %arg1[%c0_4, %c0_5, %c1, %c0_6, %c0_7] : memref<1x2x2x8x32xf32, #tpu.memory_space<vmem>>, vector<1x1x1x8x32xf32>
    %3 = vector.shape_cast %2 : vector<1x1x1x8x32xf32> to vector<1x8x32xf32>
    %4 = arith.addf %1, %3 : vector<1x8x32xf32>
    %c0_8 = arith.constant 0 : index
    %c1_9 = arith.constant 1 : index
    %c0_10 = arith.constant 0 : index
    %c0_11 = arith.constant 0 : index
    %c0_12 = arith.constant 0 : index
    %5 = vector.load %arg1[%c0_8, %c1_9, %c0_10, %c0_11, %c0_12] : memref<1x2x2x8x32xf32, #tpu.memory_space<vmem>>, vector<1x1x1x8x32xf32>
    %6 = vector.shape_cast %5 : vector<1x1x1x8x32xf32> to vector<1x8x32xf32>
    %7 = arith.addf %4, %6 : vector<1x8x32xf32>
    %c0_13 = arith.constant 0 : index
    %c1_14 = arith.constant 1 : index
    %c1_15 = arith.constant 1 : index
    %c0_16 = arith.constant 0 : index
    %c0_17 = arith.constant 0 : index
    %8 = vector.load %arg1[%c0_13, %c1_14, %c1_15, %c0_16, %c0_17] : memref<1x2x2x8x32xf32, #tpu.memory_space<vmem>>, vector<1x1x1x8x32xf32>
    %9 = vector.shape_cast %8 : vector<1x1x1x8x32xf32> to vector<1x8x32xf32>
    %10 = arith.addf %7, %9 : vector<1x8x32xf32>
    %cst = arith.constant 2.500000e-01 : f32
    %11 = vector.broadcast %cst : f32 to vector<1x8x32xf32>
    %12 = arith.mulf %10, %11 : vector<1x8x32xf32>
    %13 = vector.shape_cast %12 : vector<1x8x32xf32> to vector<8x32xf32>
    %14 = tpu.iota {dimensions = array<i32: 0>} : vector<8x1xi32>
    %c1_i32 = arith.constant 1 : i32
    %15 = tpu.dynamic_rotate %13 by %c1_i32 dim 0 : vector<8x32xf32>, i32 -> vector<8x32xf32>
    %c1_i32_18 = arith.constant 1 : i32
    %16 = vector.broadcast %c1_i32_18 : i32 to vector<8x1xi32>
    %17 = arith.cmpi sge, %14, %16 : vector<8x1xi32>
    %c9_i32 = arith.constant 9 : i32
    %18 = vector.broadcast %c9_i32 : i32 to vector<8x1xi32>
    %19 = arith.cmpi slt, %14, %18 : vector<8x1xi32>
    %20 = arith.andi %17, %19 : vector<8x1xi1>
    %cst_19 = arith.constant 0.000000e+00 : f32
    %21 = vector.shape_cast %20 : vector<8x1xi1> to vector<8x1xi1>
    %22 = vector.broadcast %21 : vector<8x1xi1> to vector<8x32xi1>
    %23 = vector.broadcast %cst_19 : f32 to vector<8x32xf32>
    %24 = arith.select %22, %15, %23 : vector<8x32xi1>, vector<8x32xf32>
    %c0_i32 = arith.constant 0 : i32
    %25 = vector.broadcast %c0_i32 : i32 to vector<8x1xi32>
    %26 = arith.cmpi sge, %14, %25 : vector<8x1xi32>
    %c8_i32 = arith.constant 8 : i32
    %27 = vector.broadcast %c8_i32 : i32 to vector<8x1xi32>
    %28 = arith.cmpi slt, %14, %27 : vector<8x1xi32>
    %29 = arith.andi %26, %28 : vector<8x1xi1>
    %cst_20 = arith.constant 0.000000e+00 : f32
    %30 = vector.shape_cast %29 : vector<8x1xi1> to vector<8x1xi1>
    %31 = vector.broadcast %30 : vector<8x1xi1> to vector<8x32xi1>
    %32 = vector.broadcast %cst_20 : f32 to vector<8x32xf32>
    %33 = arith.select %31, %13, %32 : vector<8x32xi1>, vector<8x32xf32>
    %c7_i32 = arith.constant 7 : i32
    %34 = tpu.dynamic_rotate %13 by %c7_i32 dim 0 : vector<8x32xf32>, i32 -> vector<8x32xf32>
    %c-1_i32 = arith.constant -1 : i32
    %35 = vector.broadcast %c-1_i32 : i32 to vector<8x1xi32>
    %36 = arith.cmpi sge, %14, %35 : vector<8x1xi32>
    %c7_i32_21 = arith.constant 7 : i32
    %37 = vector.broadcast %c7_i32_21 : i32 to vector<8x1xi32>
    %38 = arith.cmpi slt, %14, %37 : vector<8x1xi32>
    %39 = arith.andi %36, %38 : vector<8x1xi1>
    %cst_22 = arith.constant 0.000000e+00 : f32
    %40 = vector.shape_cast %39 : vector<8x1xi1> to vector<8x1xi1>
    %41 = vector.broadcast %40 : vector<8x1xi1> to vector<8x32xi1>
    %42 = vector.broadcast %cst_22 : f32 to vector<8x32xf32>
    %43 = arith.select %41, %34, %42 : vector<8x32xi1>, vector<8x32xf32>
    %44 = tpu.concatenate %24, %33, %43 in 1 : vector<8x32xf32>, vector<8x32xf32>, vector<8x32xf32> -> vector<8x96xf32>
    %45 = arith.truncf %44 : vector<8x96xf32> to vector<8x96xbf16>
    %c0_23 = arith.constant 0 : index
    %c0_24 = arith.constant 0 : index
    %46 = vector.load %arg2[%c0_23, %c0_24] : memref<96x128xbf16, #tpu.memory_space<vmem>>, vector<96x128xbf16>
    %cst_25 = arith.constant dense<0.000000e+00> : vector<8x128xf32>
    %47 = tpu.matmul %45, %46, %cst_25 {dimension_numbers = #tpu.dot_dimension_numbers<[1], [0], [0], [1], [0, 0, 1, 1], [], []>} : vector<8x96xbf16>, vector<96x128xbf16>, vector<8x128xf32> -> vector<8x128xf32>
    %c0_26 = arith.constant 0 : index
    %c0_27 = arith.constant 0 : index
    %48 = vector.load %arg3[%c0_26, %c0_27] : memref<1x128xf32, #tpu.memory_space<vmem>>, vector<1x128xf32>
    %49 = vector.broadcast %48 : vector<1x128xf32> to vector<8x128xf32>
    %50 = arith.addf %47, %49 : vector<8x128xf32>
    %cst_28 = arith.constant 0.000000e+00 : f32
    %51 = vector.broadcast %cst_28 : f32 to vector<8x128xf32>
    %52 = arith.cmpf ogt, %50, %51 : vector<8x128xf32>
    %cst_29 = arith.constant 1.000000e-01 : f32
    %53 = vector.broadcast %cst_29 : f32 to vector<8x128xf32>
    %54 = arith.mulf %53, %50 : vector<8x128xf32>
    %55 = arith.select %52, %50, %54 : vector<8x128xi1>, vector<8x128xf32>
    %c1_i32_30 = arith.constant 1 : i32
    %56 = tpu.dynamic_rotate %55 by %c1_i32_30 dim 0 : vector<8x128xf32>, i32 -> vector<8x128xf32>
    %c1_i32_31 = arith.constant 1 : i32
    %57 = vector.broadcast %c1_i32_31 : i32 to vector<8x1xi32>
    %58 = arith.cmpi sge, %14, %57 : vector<8x1xi32>
    %c9_i32_32 = arith.constant 9 : i32
    %59 = vector.broadcast %c9_i32_32 : i32 to vector<8x1xi32>
    %60 = arith.cmpi slt, %14, %59 : vector<8x1xi32>
    %61 = arith.andi %58, %60 : vector<8x1xi1>
    %cst_33 = arith.constant 0.000000e+00 : f32
    %62 = vector.shape_cast %61 : vector<8x1xi1> to vector<8x1xi1>
    %63 = vector.broadcast %62 : vector<8x1xi1> to vector<8x128xi1>
    %64 = vector.broadcast %cst_33 : f32 to vector<8x128xf32>
    %65 = arith.select %63, %56, %64 : vector<8x128xi1>, vector<8x128xf32>
    %c0_i32_34 = arith.constant 0 : i32
    %66 = vector.broadcast %c0_i32_34 : i32 to vector<8x1xi32>
    %67 = arith.cmpi sge, %14, %66 : vector<8x1xi32>
    %c8_i32_35 = arith.constant 8 : i32
    %68 = vector.broadcast %c8_i32_35 : i32 to vector<8x1xi32>
    %69 = arith.cmpi slt, %14, %68 : vector<8x1xi32>
    %70 = arith.andi %67, %69 : vector<8x1xi1>
    %cst_36 = arith.constant 0.000000e+00 : f32
    %71 = vector.shape_cast %70 : vector<8x1xi1> to vector<8x1xi1>
    %72 = vector.broadcast %71 : vector<8x1xi1> to vector<8x128xi1>
    %73 = vector.broadcast %cst_36 : f32 to vector<8x128xf32>
    %74 = arith.select %72, %55, %73 : vector<8x128xi1>, vector<8x128xf32>
    %c7_i32_37 = arith.constant 7 : i32
    %75 = tpu.dynamic_rotate %55 by %c7_i32_37 dim 0 : vector<8x128xf32>, i32 -> vector<8x128xf32>
    %c-1_i32_38 = arith.constant -1 : i32
    %76 = vector.broadcast %c-1_i32_38 : i32 to vector<8x1xi32>
    %77 = arith.cmpi sge, %14, %76 : vector<8x1xi32>
    %c7_i32_39 = arith.constant 7 : i32
    %78 = vector.broadcast %c7_i32_39 : i32 to vector<8x1xi32>
    %79 = arith.cmpi slt, %14, %78 : vector<8x1xi32>
    %80 = arith.andi %77, %79 : vector<8x1xi1>
    %cst_40 = arith.constant 0.000000e+00 : f32
    %81 = vector.shape_cast %80 : vector<8x1xi1> to vector<8x1xi1>
    %82 = vector.broadcast %81 : vector<8x1xi1> to vector<8x128xi1>
    %83 = vector.broadcast %cst_40 : f32 to vector<8x128xf32>
    %84 = arith.select %82, %75, %83 : vector<8x128xi1>, vector<8x128xf32>
    %85 = tpu.concatenate %65, %74, %84 in 1 : vector<8x128xf32>, vector<8x128xf32>, vector<8x128xf32> -> vector<8x384xf32>
    %86 = arith.truncf %85 : vector<8x384xf32> to vector<8x384xbf16>
    %c0_41 = arith.constant 0 : index
    %c0_42 = arith.constant 0 : index
    %87 = vector.load %arg4[%c0_41, %c0_42] : memref<384x128xbf16, #tpu.memory_space<vmem>>, vector<384x128xbf16>
    %cst_43 = arith.constant dense<0.000000e+00> : vector<8x128xf32>
    %88 = tpu.matmul %86, %87, %cst_43 {dimension_numbers = #tpu.dot_dimension_numbers<[1], [0], [0], [1], [0, 0, 1, 1], [], []>} : vector<8x384xbf16>, vector<384x128xbf16>, vector<8x128xf32> -> vector<8x128xf32>
    %c0_44 = arith.constant 0 : index
    %c0_45 = arith.constant 0 : index
    %89 = vector.load %arg5[%c0_44, %c0_45] : memref<1x128xf32, #tpu.memory_space<vmem>>, vector<1x128xf32>
    %90 = vector.broadcast %89 : vector<1x128xf32> to vector<8x128xf32>
    %91 = arith.addf %88, %90 : vector<8x128xf32>
    %cst_46 = arith.constant 0.000000e+00 : f32
    %92 = vector.broadcast %cst_46 : f32 to vector<8x128xf32>
    %93 = arith.cmpf ogt, %91, %92 : vector<8x128xf32>
    %cst_47 = arith.constant 1.000000e-01 : f32
    %94 = vector.broadcast %cst_47 : f32 to vector<8x128xf32>
    %95 = arith.mulf %94, %91 : vector<8x128xf32>
    %96 = arith.select %93, %91, %95 : vector<8x128xi1>, vector<8x128xf32>
    %c0_48 = arith.constant 0 : index
    %c0_49 = arith.constant 0 : index
    %97 = vector.load %arg6[%c0_48, %c0_49] : memref<8x128xf32, #tpu.memory_space<vmem>>, vector<8x128xf32>
    tpu.vector_store %arg6[%c0_48, %c0_49], %96 {strides = array<i32>} : memref<8x128xf32, #tpu.memory_space<vmem>>, vector<8x128xf32>,
    return
  }
  func.func @transform_0(%arg0: i32) -> (i32, i32, i32, i32, i32) {
    %c0_i32 = arith.constant 0 : i32
    %c0_i32_0 = arith.constant 0 : i32
    %c0_i32_1 = arith.constant 0 : i32
    %c0_i32_2 = arith.constant 0 : i32
    %c0_i32_3 = arith.constant 0 : i32
    return %arg0, %c0_i32, %c0_i32_0, %c0_i32_1, %c0_i32_2 : i32, i32, i32, i32, i32
  }
  func.func @transform_1(%arg0: i32) -> (i32, i32) {
    %c0_i32 = arith.constant 0 : i32
    %c0_i32_0 = arith.constant 0 : i32
    %c0_i32_1 = arith.constant 0 : i32
    return %c0_i32, %c0_i32_0 : i32, i32
  }
  func.func @transform_2(%arg0: i32) -> (i32, i32) {
    %c0_i32 = arith.constant 0 : i32
    %c0_i32_0 = arith.constant 0 : i32
    %c0_i32_1 = arith.constant 0 : i32
    return %c0_i32, %c0_i32_0 : i32, i32
  }
  func.func @transform_3(%arg0: i32) -> (i32, i32) {
    %c0_i32 = arith.constant 0 : i32
    %c0_i32_0 = arith.constant 0 : i32
    %c0_i32_1 = arith.constant 0 : i32
    return %c0_i32, %c0_i32_0 : i32, i32
  }
  func.func @transform_4(%arg0: i32) -> (i32, i32) {
    %c0_i32 = arith.constant 0 : i32
    %c0_i32_0 = arith.constant 0 : i32
    %c0_i32_1 = arith.constant 0 : i32
    return %c0_i32, %c0_i32_0 : i32, i32
  }
  func.func @transform_5(%arg0: i32) -> (i32, i32) {
    %c0_i32 = arith.constant 0 : i32
    %c0_i32_0 = arith.constant 0 : i32
    return %arg0, %c0_i32 : i32, i32
  }
}

</mosaic_0001>

<llo_original>
// kernel: tile.13
$region0: #{tile.13}
  #allocation0 [shape = 's32[1]{0}', space=sflag, size = 0x4, scoped, tag = 'scoped memory for tile.13']
  %s0 = inlined_call_operand.vmem [shape: f32[16], index: 0, kind: input, shape index: {}]
  %s1 = inlined_call_operand.vmem [shape: f32[8,16], index: 1, kind: output, shape index: {}]
  // Predicated region
  $region2: #{tile.13} parent=0 // pred_check
    _
  $region3: #{tile.13} parent=0 // pred_check_branch
    %3 = sbr.rel (0) target = $region5
  $region4: #{tile.13} parent=0 // pred_region
    _
  $region5: #{tile.13} parent=0 // pred_fallthru
    _
  %v4 = vld [vmem:[%s0] ss:$0 sm:$0xff]
  %5 = vst [vmem:[%s1] sm:$0xff] %v4

// kernel: tile.14
$region0: #{tile.14}
  %s0 = inlined_call_operand.vmem [shape: f32[8,16], index: 0, kind: input, shape index: {}]
  %s1 = inlined_call_operand.vmem [shape: f32[1,128], index: 1, kind: output, shape index: {}]
  $region1: #{tile.14} parent=0
    #allocation0 [shape = 'u8[4096]{0}', space=vmem, size = 0x1000, scoped, tag = 'scoped mem for output reshape']
    %v2 = vld [vmem:[%s0] sm:$0x1]
    %vm3 = vcmask 130048
    %4 = vst.msk [vmem:[#allocation0] sm:$0x1] %vm3, %v2
    %s5 = scalar_lea.vmem %s0, 7
    %v6 = vld [vmem:[%s5] sm:$0x1]
    %7 = vrot.lane.b32.xlu0 %v6, 112
    %v8 = vpop.permute.xlu0 %7
    %vm9 = vcmask 1048448
    %10 = vst.msk [vmem:[#allocation0] sm:$0x1] %vm9, %v8
    %s11 = scalar_lea.vmem %s0, 6
    %v12 = vld [vmem:[%s11] sm:$0x1]
    %13 = vrot.lane.b32.xlu0 %v12, 96
    %v14 = vpop.permute.xlu0 %13
    %vm15 = vcmask 917248
    %16 = vst.msk [vmem:[#allocation0] sm:$0x1] %vm15, %v14
    %s17 = scalar_lea.vmem %s0, 5
    %v18 = vld [vmem:[%s17] sm:$0x1]
    %19 = vrot.lane.b32.xlu0 %v18, 80
    %v20 = vpop.permute.xlu0 %19
    %vm21 = vcmask 786048
    %22 = vst.msk [vmem:[#allocation0] sm:$0x1] %vm21, %v20
    %s23 = scalar_lea.vmem %s0, 4
    %v24 = vld [vmem:[%s23] sm:$0x1]
    %25 = vrot.lane.b32.xlu0 %v24, 64
    %v26 = vpop.permute.xlu0 %25
    %vm27 = vcmask 654848
    %28 = vst.msk [vmem:[#allocation0] sm:$0x1] %vm27, %v26
    %s29 = scalar_lea.vmem %s0, 3
    %v30 = vld [vmem:[%s29] sm:$0x1]
    %31 = vrot.lane.b32.xlu0 %v30, 48
    %v32 = vpop.permute.xlu0 %31
    %vm33 = vcmask 523648
    %34 = vst.msk [vmem:[#allocation0] sm:$0x1] %vm33, %v32
    %s35 = scalar_lea.vmem %s0, 2
    %v36 = vld [vmem:[%s35] sm:$0x1]
    %37 = vrot.lane.b32.xlu0 %v36, 32
    %v38 = vpop.permute.xlu0 %37
    %vm39 = vcmask 392448
    %40 = vst.msk [vmem:[#allocation0] sm:$0x1] %vm39, %v38
    %s41 = scalar_lea.vmem %s0, 1
    %v42 = vld [vmem:[%s41] sm:$0x1]
    %43 = vrot.lane.b32.xlu0 %v42, 16
    %v44 = vpop.permute.xlu0 %43
    %vm45 = vcmask 261248
    %46 = vst.msk [vmem:[#allocation0] sm:$0x1] %vm45, %v44
    %s48 = sshllo.u32 0, 1
    %v50 = vld [vmem:[#allocation0] sm:%s48]
    %s51 = sshllo.u32 0, 1
    %52 = vst [vmem:[%s1] sm:%s51] %v50

// kernel: down_forward.1
$region0: #{down_forward.1}
  #allocation0 [shape = 'u32[]', space=smem, size = 0x4, offset = 0x4, fixed_abs, tag = 'smem constant byte address 0x4 - core index']
  #allocation1 [shape = 'u32[144,128]{1,0:T(1,128)}', space=vmem, size = 0x12000, scoped, tag = 'internal scratch']
  %s0 = inlined_call_operand.vmem [shape: f32[2,2,2,8,32], index: 0, kind: input, shape index: {}]
  %s1 = inlined_call_operand.vmem [shape: bf16[96,128], index: 1, kind: input, shape index: {}]
  %s2 = inlined_call_operand.vmem [shape: f32[1,128], index: 2, kind: input, shape index: {}]
  %s3 = inlined_call_operand.vmem [shape: bf16[384,128], index: 3, kind: input, shape index: {}]
  %s4 = inlined_call_operand.vmem [shape: f32[1,128], index: 4, kind: input, shape index: {}]
  %s5 = inlined_call_operand.vmem [shape: f32[16,128], index: 5, kind: output, shape index: {}]
  %s6 = sld [smem:[#allocation0]]
  $region53: #{down_forward.1} parent=0
    _
  %s8 = ssub.s32 1, %s6
  %s9 = scalar_select 0, %s8, %s6
  loop: start=0, step=1, limit=4
  $region2: #{down_forward.1} parent=0 // loop_pre_header
    _
  $region3: #{down_forward.1} parent=0 // loop_header
    %s11 = sphi 0, %s15
    %p12 = scmp.ge.s32.totalorder %s11, 4
    %s21 = sphi 0, %s23
    %s24 = sphi 0, %s21
    %s25 = sphi 0, %s24
    %s41 = sphi 0, %s25
    %s45 = sphi 0, %s45
    %s47 = sphi 0, %s45
    %s48 = sphi 0, %s47
    %s62 = sphi 0, %s48
    %s66 = sphi 0, %s66
    %s68 = sphi 0, %s66
    %s69 = sphi 0, %s68
    %s83 = sphi 0, %s69
    %s87 = sphi 0, %s87
    %s89 = sphi 0, %s87
    %s90 = sphi 0, %s89
    %s104 = sphi 0, %s90
    %s108 = sphi 0, %s108
    %s110 = sphi 0, %s108
    %s111 = sphi 0, %s110
    %s125 = sphi 0, %s111
    %s131 = sphi 0, %s133
    %s134 = sphi 0, %s131
    %s135 = sphi 0, %s134
    %s151 = sphi 0, %s135
  $region4: #{down_forward.1} parent=0 // loop_header_branch
    %14 = sbr.rel (%p12) target = $region8
  $region5: #{down_forward.1} parent=0 // loop_body
    %s16 = ssub.s32 %s11, 1
    %s17 = ssub.s32 %s11, 2
    %s18 = sadd.s32 %s11, 1
    %s19 = ssub.s32 %s11, %s18
    %p20 = scmp.eq.s32.totalorder %s19, 0
    %s22 = sadd.s32 %s21, 1
    %s23 = scalar_select %p20, %s21, %s22
    %p26 = pneg %p20
    %p27 = scmp.eq.s32.totalorder %s11, 1
    %p28 = por %p26, %p27
    %p29 = scmp.ne.s32.totalorder %s21, %s24
    %p30 = scmp.eq.s32.totalorder %s11, 0
    %p31 = por %p29, %p30
    %p32 = scmp.ne.s32.totalorder %s21, %s24
    %p33 = scmp.eq.s32.totalorder %s16, 1
    %p34 = por %p32, %p33
    %p35 = scmp.ne.s32.totalorder %s24, %s25
    %p36 = scmp.eq.s32.totalorder %s16, 0
    %p37 = por %p35, %p36
    %p38 = scmp.ne.s32.totalorder %s24, %s25
    %p39 = scmp.eq.s32.totalorder %s17, 1
    %p40 = por %p38, %p39
    %p42 = scmp.ne.s32.totalorder %s25, %s41
    %p43 = scmp.eq.s32.totalorder %s17, 0
    %p44 = por %p42, %p43
    %s46 = sadd.s32 %s45, 1
    %p49 = scmp.eq.s32.totalorder %s11, 1
    %p50 = scmp.ne.s32.totalorder %s45, %s47
    %p51 = scmp.eq.s32.totalorder %s11, 0
    %p52 = por %p50, %p51
    %p53 = scmp.ne.s32.totalorder %s45, %s47
    %p54 = scmp.eq.s32.totalorder %s16, 1
    %p55 = por %p53, %p54
    %p56 = scmp.ne.s32.totalorder %s47, %s48
    %p57 = scmp.eq.s32.totalorder %s16, 0
    %p58 = por %p56, %p57
    %p59 = scmp.ne.s32.totalorder %s47, %s48
    %p60 = scmp.eq.s32.totalorder %s17, 1
    %p61 = por %p59, %p60
    %p63 = scmp.ne.s32.totalorder %s48, %s62
    %p64 = scmp.eq.s32.totalorder %s17, 0
    %p65 = por %p63, %p64
    %s67 = sadd.s32 %s66, 1
    %p70 = scmp.eq.s32.totalorder %s11, 1
    %p71 = scmp.ne.s32.totalorder %s66, %s68
    %p72 = scmp.eq.s32.totalorder %s11, 0
    %p73 = por %p71, %p72
    %p74 = scmp.ne.s32.totalorder %s66, %s68
    %p75 = scmp.eq.s32.totalorder %s16, 1
    %p76 = por %p74, %p75
    %p77 = scmp.ne.s32.totalorder %s68, %s69
    %p78 = scmp.eq.s32.totalorder %s16, 0
    %p79 = por %p77, %p78
    %p80 = scmp.ne.s32.totalorder %s68, %s69
    %p81 = scmp.eq.s32.totalorder %s17, 1
    %p82 = por %p80, %p81
    %p84 = scmp.ne.s32.totalorder %s69, %s83
    %p85 = scmp.eq.s32.totalorder %s17, 0
    %p86 = por %p84, %p85
    %s88 = sadd.s32 %s87, 1
    %p91 = scmp.eq.s32.totalorder %s11, 1
    %p92 = scmp.ne.s32.totalorder %s87, %s89
    %p93 = scmp.eq.s32.totalorder %s11, 0
    %p94 = por %p92, %p93
    %p95 = scmp.ne.s32.totalorder %s87, %s89
    %p96 = scmp.eq.s32.totalorder %s16, 1
    %p97 = por %p95, %p96
    %p98 = scmp.ne.s32.totalorder %s89, %s90
    %p99 = scmp.eq.s32.totalorder %s16, 0
    %p100 = por %p98, %p99
    %p101 = scmp.ne.s32.totalorder %s89, %s90
    %p102 = scmp.eq.s32.totalorder %s17, 1
    %p103 = por %p101, %p102
    %p105 = scmp.ne.s32.totalorder %s90, %s104
    %p106 = scmp.eq.s32.totalorder %s17, 0
    %p107 = por %p105, %p106
    %s109 = sadd.s32 %s108, 1
    %p112 = scmp.eq.s32.totalorder %s11, 1
    %p113 = scmp.ne.s32.totalorder %s108, %s110
    %p114 = scmp.eq.s32.totalorder %s11, 0
    %p115 = por %p113, %p114
    %p116 = scmp.ne.s32.totalorder %s108, %s110
    %p117 = scmp.eq.s32.totalorder %s16, 1
    %p118 = por %p116, %p117
    %p119 = scmp.ne.s32.totalorder %s110, %s111
    %p120 = scmp.eq.s32.totalorder %s16, 0
    %p121 = por %p119, %p120
    %p122 = scmp.ne.s32.totalorder %s110, %s111
    %p123 = scmp.eq.s32.totalorder %s17, 1
    %p124 = por %p122, %p123
    %p126 = scmp.ne.s32.totalorder %s111, %s125
    %p127 = scmp.eq.s32.totalorder %s17, 0
    %p128 = por %p126, %p127
    %s129 = ssub.s32 %s11, %s18
    %p130 = scmp.eq.s32.totalorder %s129, 0
    %s132 = sadd.s32 %s131, 1
    %s133 = scalar_select %p130, %s131, %s132
    %p136 = pneg %p130
    %p137 = scmp.eq.s32.totalorder %s11, 1
    %p138 = por %p136, %p137
    %p139 = scmp.ne.s32.totalorder %s131, %s134
    %p140 = scmp.eq.s32.totalorder %s11, 0
    %p141 = por %p139, %p140
    %p142 = scmp.ne.s32.totalorder %s131, %s134
    %p143 = scmp.eq.s32.totalorder %s16, 1
    %p144 = por %p142, %p143
    %p145 = scmp.ne.s32.totalorder %s134, %s135
    %p146 = scmp.eq.s32.totalorder %s16, 0
    %p147 = por %p145, %p146
    %p148 = scmp.ne.s32.totalorder %s134, %s135
    %p149 = scmp.eq.s32.totalorder %s17, 1
    %p150 = por %p148, %p149
    %p152 = scmp.ne.s32.totalorder %s135, %s151
    %p153 = scmp.eq.s32.totalorder %s17, 0
    %p154 = por %p152, %p153
    %p155 = scmp.le.s32.totalorder 1, %s11
    %p156 = scmp.lt.s32.totalorder %s11, 3
    %p157 = pnand %p155, %p156
    %p158 = pneg %p157
    // Predicated region
    $region9: #{down_forward.1} parent=5 // pred_check
      _
    $region10: #{down_forward.1} parent=5 // pred_check_branch
      %160 = sbr.rel (%p157) target = $region12
    $region11: #{down_forward.1} parent=5 // pred_region
      %s161 = ssub.s32 %s11, 1
      // Predicated region
      $region13: #{down_forward.1} parent=11 // pred_check
        %p162 = pneg %p58
      $region14: #{down_forward.1} parent=11 // pred_check_branch
        %164 = sbr.rel (%p162) target = $region16
      $region15: #{down_forward.1} parent=11 // pred_region
        _
      $region16: #{down_forward.1} parent=11 // pred_fallthru
        _
      // Predicated region
      $region17: #{down_forward.1} parent=11 // pred_check
        %p165 = pneg %p79
      $region18: #{down_forward.1} parent=11 // pred_check_branch
        %167 = sbr.rel (%p165) target = $region20
      $region19: #{down_forward.1} parent=11 // pred_region
        _
      $region20: #{down_forward.1} parent=11 // pred_fallthru
        _
      // Predicated region
      $region21: #{down_forward.1} parent=11 // pred_check
        %p168 = pneg %p100
      $region22: #{down_forward.1} parent=11 // pred_check_branch
        %170 = sbr.rel (%p168) target = $region24
      $region23: #{down_forward.1} parent=11 // pred_region
        _
      $region24: #{down_forward.1} parent=11 // pred_fallthru
        _
      // Predicated region
      $region25: #{down_forward.1} parent=11 // pred_check
        %p171 = pneg %p121
      $region26: #{down_forward.1} parent=11 // pred_check_branch
        %173 = sbr.rel (%p171) target = $region28
      $region27: #{down_forward.1} parent=11 // pred_region
        _
      $region28: #{down_forward.1} parent=11 // pred_fallthru
        _
    $region12: #{down_forward.1} parent=5 // pred_fallthru
      _
    %p174 = scmp.lt.s32.totalorder %s11, 2
    // Predicated region
    $region29: #{down_forward.1} parent=5 // pred_check
      %p175 = pneg %p174
    $region30: #{down_forward.1} parent=5 // pred_check_branch
      %177 = sbr.rel (%p175) target = $region32
    $region31: #{down_forward.1} parent=5 // pred_region
      // Predicated region
      $region33: #{down_forward.1} parent=31 // pred_check
        %p178 = pneg %p31
      $region34: #{down_forward.1} parent=31 // pred_check_branch
        %180 = sbr.rel (%p178) target = $region36
      $region35: #{down_forward.1} parent=31 // pred_region
        %p181 = scmp.lt.s32.totalorder %s11, 1
        %s182 = scalar_select %p181, %s11, 1
        %s183 = smul.addr %s182, 4
        %s184 = smul.addr %s183, 8
        %s185 = scalar_lea.vmem %s0, %s184
      $region36: #{down_forward.1} parent=31 // pred_fallthru
        _
    $region32: #{down_forward.1} parent=5 // pred_fallthru
      _
    %p186 = scmp.le.s32.totalorder 1, %s11
    %p187 = scmp.lt.s32.totalorder %s11, 3
    %p188 = pnand %p186, %p187
    %p189 = pneg %p188
    // Predicated region
    $region37: #{down_forward.1} parent=5 // pred_check
      _
    $region38: #{down_forward.1} parent=5 // pred_check_branch
      %191 = sbr.rel (%p188) target = $region40
    $region39: #{down_forward.1} parent=5 // pred_region
      %s192 = ssub.s32 %s11, 1
      %p193 = scmp.lt.s32.totalorder %s16, 1
      %s194 = scalar_select %p193, %s16, 1
      %s195 = smul.addr %s194, 4
      %s196 = smul.addr %s195, 8
      %s197 = scalar_lea.vmem %s0, %s196
      %p198 = pneg %p37
      %p199 = pneg %p34
      %p200 = pneg %p58
      %p201 = pneg %p55
      %p202 = pneg %p79
      %p203 = pneg %p76
      %p204 = pneg %p100
      %p205 = pneg %p97
      %p206 = pneg %p121
      %p207 = pneg %p118
      %p208 = pneg %p147
      %p209 = pneg %p144
      %p210 = scmp.lt.s32.totalorder %s16, 1
      %s211 = scalar_select %p210, %s16, 1
      %s212 = smul.addr %s211, 8
      %s213 = scalar_lea.vmem %s5, %s212
      %p214 = scmp.lt.s32.totalorder %s16, 1
      %s215 = scalar_select %p214, %s16, 1
      %s216 = smul.addr %s215, 4
      %s217 = smul.addr %s216, 8
      %s218 = scalar_lea.vmem %s0, %s217
      %p219 = scmp.lt.s32.totalorder %s16, 1
      %s220 = scalar_select %p219, %s16, 1
      %s221 = smul.addr %s220, 8
      %s222 = scalar_lea.vmem %s5, %s221
      %v224 = vld [vmem:[%s218] sm:$0xff]
      %s225 = scalar_lea.vmem %s218, 8
      %v226 = vld [vmem:[%s225] sm:$0xff]
      %v227 = vadd.f32 %v224, %v226
      %s228 = scalar_lea.vmem %s218, 16
      %v229 = vld [vmem:[%s228] sm:$0xff]
      %v230 = vadd.f32 %v227, %v229
      %s231 = scalar_lea.vmem %s218, 24
      %v232 = vld [vmem:[%s231] sm:$0xff]
      %v233 = vadd.f32 %v230, %v232
      %v234 = vmul.f32 %v233, 0.25
      %v235 = vlaneseq
      %v236 = vshrl.u32 %v235, 7
      %v237 = vrot.slane %v234, 7
      %vm238 = vcmp.ge.s32.totalorder %v236, 1
      %vm239 = vcmp.lt.s32.totalorder %v236, 9
      %vm240 = vmand %vm238, %vm239
      %v241 = vsel %vm240, 1, 0
      %vm242 = vcmp.eq.s32.totalorder %v241, 1
      %v243 = vsel %vm242, %v237, 0.0
      %vm244 = vcmp.ge.s32.totalorder %v236, 0
      %vm245 = vcmp.lt.s32.totalorder %v236, 8
      %vm246 = vmand %vm244, %vm245
      %v247 = vsel %vm246, 1, 0
      %vm248 = vcmp.eq.s32.totalorder %v247, 1
      %v249 = vsel %vm248, %v234, 0.0
      %v250 = vrot.slane %v234, 1
      %vm251 = vcmp.ge.s32.totalorder %v236, 4294967295
      %vm252 = vcmp.lt.s32.totalorder %v236, 7
      %vm253 = vmand %vm251, %vm252
      %v254 = vsel %vm253, 1, 0
      %vm255 = vcmp.eq.s32.totalorder %v254, 1
      %v256 = vsel %vm255, %v250, 0.0
      %258 = vrot.lane.b32.xlu0 %v249, 32
      %v259 = vpop.permute.xlu0 %258
      %262 = vrot.lane.b32.xlu0 %v256, 64
      %v263 = vpop.permute.xlu0 %262
      %vm265 = vcmask 261120
      %v266 = vsel %vm265, %v243, %v259
      %vm267 = vcmask 523264
      %v268 = vsel %vm267, %v266, %v263
      %v269 = vpack.c.bf16 %v268, %v268
      %v270 = vld [vmem:[%s1] sm:$0xf]
      %v271 = vld [vmem:[%s1 + $0x4] sm:$0xf]
      %v272 = vld [vmem:[%s1 + $0x8] sm:$0xf]
      %v273 = vld [vmem:[%s1 + $0xc] sm:$0xf]
      %v274 = vld [vmem:[%s1 + $0x10] sm:$0xf]
      %v275 = vld [vmem:[%s1 + $0x14] sm:$0xf]
      %v276 = vld [vmem:[%s1 + $0x18] sm:$0xf]
      %v277 = vld [vmem:[%s1 + $0x1c] sm:$0xf]
      %v278 = vld [vmem:[%s1 + $0x20] sm:$0xf]
      %v279 = vld [vmem:[%s1 + $0x24] sm:$0xf]
      %v280 = vld [vmem:[%s1 + $0x28] sm:$0xf]
      %v281 = vld [vmem:[%s1 + $0x2c] sm:$0xf]
      %v282 = vld [vmem:[%s2] sm:$0x1]
      %v284 = vlaneseq
      %v285 = vshrl.u32 %v284, 7
      %v286 = vsub.s32 0, %v285
      %v287 = vrot.slane %v282, %v286
      %v301 = vunpack.c.l.b16 %v270
      %v302 = vunpack.c.l.b16 %v271
      %v303 = vunpack.c.l.b16 %v272
      %v304 = vunpack.c.l.b16 %v273
      %v305 = vunpack.c.l.b16 %v274
      %v306 = vunpack.c.l.b16 %v275
      %v307 = vunpack.c.l.b16 %v276
      %v308 = vunpack.c.l.b16 %v277
      %v309 = vunpack.c.l.b16 %v278
      %v310 = vunpack.c.l.b16 %v279
      %v311 = vunpack.c.l.b16 %v280
      %v312 = vunpack.c.l.b16 %v281
      %v313 = vpack.c.b16 %v302, %v301
      %v314 = vpack.c.b16 %v304, %v303
      %v315 = vpack.c.b16 %v306, %v305
      %v316 = vpack.c.b16 %v308, %v307
      %v317 = vpack.c.b16 %v310, %v309
      %v318 = vpack.c.b16 %v312, %v311
      %vm325 = vcmask 785408
      %v327 = vsel %vm325, %v269, 0
      %329 = vmatprep.subr.bf16.mxu0 0
      %330 = vmatpush1.bf16.msra.mxu0 %v313
      %331 = vmatprep.subr.bf16.mxu0 0
      %332 = vmatpush1.bf16.msra.mxu0 %v314
      %333 = vmatprep.subr.bf16.mxu0 0
      %334 = vmatpush1.bf16.msra.mxu0 %v315
      %335 = vmatprep.subr.bf16.mxu0 0
      %336 = vmatpush1.bf16.msra.mxu0 %v316
      %337 = vmatprep.subr.bf16.mxu0 0
      %338 = vmatpush1.bf16.msra.mxu0 %v317
      %339 = vmatprep.subr.bf16.mxu0 0
      %340 = vmatpush1.bf16.msra.mxu0 %v318
      %341 = vmatprep.subr.bf16.mxu0 0
      %342 = vmatpush1.bf16.msra.mxu0 0
      %343 = vmatprep.subr.bf16.mxu0 0
      %344 = vmatpush1.bf16.msra.mxu0 0
      %345 = vmatprep.subr.bf16.mxu0 0
      %346 = vmatpush1.bf16.msra.mxu0 0
      %347 = vmatprep.subr.bf16.mxu0 0
      %348 = vmatpush1.bf16.msra.mxu0 0
      %349 = vmatprep.subr.bf16.mxu0 0
      %350 = vmatpush1.bf16.msra.mxu0 0
      %351 = vmatprep.subr.bf16.mxu0 0
      %352 = vmatpush1.bf16.msra.mxu0 0
      %353 = vmatprep.subr.bf16.mxu0 0
      %354 = vmatpush1.bf16.msra.mxu0 0
      %355 = vmatprep.subr.bf16.mxu0 0
      %356 = vmatpush1.bf16.msra.mxu0 0
      %357 = vmatprep.subr.bf16.mxu0 0
      %358 = vmatpush1.bf16.msra.mxu0 0
      %359 = vmatprep.subr.bf16.mxu0 0
      %360 = vmatpush1.bf16.msra.mxu0 0
      %361 = vmatprep.mubr.bf16.mxu0 0
      %362 = vmatmul.mubr.bf16.gmra.mrb[0].mxu0 %v327
      %v363 = vpop.f32.mrb[0].mxu0
      %v364 = vadd.f32 %v287, %v363
      %v365 = vpop.f32.mrb[0].mxu0
      %v366 = vpop.f32.mrb[0].mxu0
      %v367 = vpop.f32.mrb[0].mxu0
      %368 = vdwg.mxu0
      %vm369 = vcmp.gt.f32.partialorder %v364, 0.0
      %v370 = vmul.f32 %v364, 0.1
      %v371 = vsel %vm369, %v364, %v370
      %v372 = vrot.slane %v371, 7
      %v373 = vsel %vm242, %v372, 0.0
      %v374 = vsel %vm248, %v371, 0.0
      %v375 = vrot.slane %v371, 1
      %v376 = vsel %vm255, %v375, 0.0
      %v377 = vpack.c.bf16 %v373, %v373
      %v378 = vpack.c.bf16 %v374, %v374
      %v379 = vpack.c.bf16 %v376, %v376
      %v380 = vld [vmem:[%s3] sm:$0xf]
      %v381 = vld [vmem:[%s3 + $0x4] sm:$0xf]
      %v382 = vld [vmem:[%s3 + $0x8] sm:$0xf]
      %v383 = vld [vmem:[%s3 + $0xc] sm:$0xf]
      %v384 = vld [vmem:[%s3 + $0x10] sm:$0xf]
      %v385 = vld [vmem:[%s3 + $0x14] sm:$0xf]
      %v386 = vld [vmem:[%s3 + $0x18] sm:$0xf]
      %v387 = vld [vmem:[%s3 + $0x1c] sm:$0xf]
      %v388 = vld [vmem:[%s3 + $0x20] sm:$0xf]
      %v389 = vld [vmem:[%s3 + $0x24] sm:$0xf]
      %v390 = vld [vmem:[%s3 + $0x28] sm:$0xf]
      %v391 = vld [vmem:[%s3 + $0x2c] sm:$0xf]
      %v392 = vld [vmem:[%s3 + $0x30] sm:$0xf]
      %v393 = vld [vmem:[%s3 + $0x34] sm:$0xf]
      %v394 = vld [vmem:[%s3 + $0x38] sm:$0xf]
      %v395 = vld [vmem:[%s3 + $0x3c] sm:$0xf]
      %v396 = vld [vmem:[%s3 + $0x40] sm:$0xf]
      %v397 = vld [vmem:[%s3 + $0x44] sm:$0xf]
      %v398 = vld [vmem:[%s3 + $0x48] sm:$0xf]
      %v399 = vld [vmem:[%s3 + $0x4c] sm:$0xf]
      %v400 = vld [vmem:[%s3 + $0x50] sm:$0xf]
      %v401 = vld [vmem:[%s3 + $0x54] sm:$0xf]
      %v402 = vld [vmem:[%s3 + $0x58] sm:$0xf]
      %v403 = vld [vmem:[%s3 + $0x5c] sm:$0xf]
      %v404 = vld [vmem:[%s3 + $0x60] sm:$0xf]
      %v405 = vld [vmem:[%s3 + $0x64] sm:$0xf]
      %v406 = vld [vmem:[%s3 + $0x68] sm:$0xf]
      %v407 = vld [vmem:[%s3 + $0x6c] sm:$0xf]
      %v408 = vld [vmem:[%s3 + $0x70] sm:$0xf]
      %v409 = vld [vmem:[%s3 + $0x74] sm:$0xf]
      %v410 = vld [vmem:[%s3 + $0x78] sm:$0xf]
      %v411 = vld [vmem:[%s3 + $0x7c] sm:$0xf]
      %v412 = vld [vmem:[%s3 + $0x80] sm:$0xf]
      %v413 = vld [vmem:[%s3 + $0x84] sm:$0xf]
      %v414 = vld [vmem:[%s3 + $0x88] sm:$0xf]
      %v415 = vld [vmem:[%s3 + $0x8c] sm:$0xf]
      %v416 = vld [vmem:[%s3 + $0x90] sm:$0xf]
      %v417 = vld [vmem:[%s3 + $0x94] sm:$0xf]
      %v418 = vld [vmem:[%s3 + $0x98] sm:$0xf]
      %v419 = vld [vmem:[%s3 + $0x9c] sm:$0xf]
      %v420 = vld [vmem:[%s3 + $0xa0] sm:$0xf]
      %v421 = vld [vmem:[%s3 + $0xa4] sm:$0xf]
      %v422 = vld [vmem:[%s3 + $0xa8] sm:$0xf]
      %v423 = vld [vmem:[%s3 + $0xac] sm:$0xf]
      %v424 = vld [vmem:[%s3 + $0xb0] sm:$0xf]
      %v425 = vld [vmem:[%s3 + $0xb4] sm:$0xf]
      %v426 = vld [vmem:[%s3 + $0xb8] sm:$0xf]
      %v427 = vld [vmem:[%s3 + $0xbc] sm:$0xf]
      %v428 = vld [vmem:[%s4] sm:$0x1]
      %v430 = vlaneseq
      %v431 = vshrl.u32 %v430, 7
      %v432 = vsub.s32 0, %v431
      %v433 = vrot.slane %v428, %v432
      %v483 = vunpack.c.l.b16 %v380
      %v484 = vunpack.c.l.b16 %v381
      %v485 = vunpack.c.l.b16 %v382
      %v486 = vunpack.c.l.b16 %v383
      %v487 = vunpack.c.l.b16 %v384
      %v488 = vunpack.c.l.b16 %v385
      %v489 = vunpack.c.l.b16 %v386
      %v490 = vunpack.c.l.b16 %v387
      %v491 = vunpack.c.l.b16 %v388
      %v492 = vunpack.c.l.b16 %v389
      %v493 = vunpack.c.l.b16 %v390
      %v494 = vunpack.c.l.b16 %v391
      %v495 = vunpack.c.l.b16 %v392
      %v496 = vunpack.c.l.b16 %v393
      %v497 = vunpack.c.l.b16 %v394
      %v498 = vunpack.c.l.b16 %v395
      %v499 = vunpack.c.l.b16 %v396
      %v500 = vunpack.c.l.b16 %v397
      %v501 = vunpack.c.l.b16 %v398
      %v502 = vunpack.c.l.b16 %v399
      %v503 = vunpack.c.l.b16 %v400
      %v504 = vunpack.c.l.b16 %v401
      %v505 = vunpack.c.l.b16 %v402
      %v506 = vunpack.c.l.b16 %v403
      %v507 = vunpack.c.l.b16 %v404
      %v508 = vunpack.c.l.b16 %v405
      %v509 = vunpack.c.l.b16 %v406
      %v510 = vunpack.c.l.b16 %v407
      %v511 = vunpack.c.l.b16 %v408
      %v512 = vunpack.c.l.b16 %v409
      %v513 = vunpack.c.l.b16 %v410
      %v514 = vunpack.c.l.b16 %v411
      %v515 = vunpack.c.l.b16 %v412
      %v516 = vunpack.c.l.b16 %v413
      %v517 = vunpack.c.l.b16 %v414
      %v518 = vunpack.c.l.b16 %v415
      %v519 = vunpack.c.l.b16 %v416
      %v520 = vunpack.c.l.b16 %v417
      %v521 = vunpack.c.l.b16 %v418
      %v522 = vunpack.c.l.b16 %v419
      %v523 = vunpack.c.l.b16 %v420
      %v524 = vunpack.c.l.b16 %v421
      %v525 = vunpack.c.l.b16 %v422
      %v526 = vunpack.c.l.b16 %v423
      %v527 = vunpack.c.l.b16 %v424
      %v528 = vunpack.c.l.b16 %v425
      %v529 = vunpack.c.l.b16 %v426
      %v530 = vunpack.c.l.b16 %v427
      %v531 = vpack.c.b16 %v484, %v483
      %v532 = vpack.c.b16 %v486, %v485
      %v533 = vpack.c.b16 %v488, %v487
      %v534 = vpack.c.b16 %v490, %v489
      %v535 = vpack.c.b16 %v492, %v491
      %v536 = vpack.c.b16 %v494, %v493
      %v537 = vpack.c.b16 %v496, %v495
      %v538 = vpack.c.b16 %v498, %v497
      %v539 = vpack.c.b16 %v500, %v499
      %v540 = vpack.c.b16 %v502, %v501
      %v541 = vpack.c.b16 %v504, %v503
      %v542 = vpack.c.b16 %v506, %v505
      %v543 = vpack.c.b16 %v508, %v507
      %v544 = vpack.c.b16 %v510, %v509
      %v545 = vpack.c.b16 %v512, %v511
      %v546 = vpack.c.b16 %v514, %v513
      %v547 = vpack.c.b16 %v516, %v515
      %v548 = vpack.c.b16 %v518, %v517
      %v549 = vpack.c.b16 %v520, %v519
      %v550 = vpack.c.b16 %v522, %v521
      %v551 = vpack.c.b16 %v524, %v523
      %v552 = vpack.c.b16 %v526, %v525
      %v553 = vpack.c.b16 %v528, %v527
      %v554 = vpack.c.b16 %v530, %v529
      %579 = vmatprep.subr.bf16.mxu0 0
      %580 = vmatpush1.bf16.msra.mxu0 %v531
      %581 = vmatprep.subr.bf16.mxu0 0
      %582 = vmatpush1.bf16.msra.mxu0 %v532
      %583 = vmatprep.subr.bf16.mxu0 0
      %584 = vmatpush1.bf16.msra.mxu0 %v533
      %585 = vmatprep.subr.bf16.mxu0 0
      %586 = vmatpush1.bf16.msra.mxu0 %v534
      %587 = vmatprep.subr.bf16.mxu0 0
      %588 = vmatpush1.bf16.msra.mxu0 %v535
      %589 = vmatprep.subr.bf16.mxu0 0
      %590 = vmatpush1.bf16.msra.mxu0 %v536
      %591 = vmatprep.subr.bf16.mxu0 0
      %592 = vmatpush1.bf16.msra.mxu0 %v537
      %593 = vmatprep.subr.bf16.mxu0 0
      %594 = vmatpush1.bf16.msra.mxu0 %v538
      %595 = vmatprep.subr.bf16.mxu0 0
      %596 = vmatpush1.bf16.msra.mxu0 %v539
      %597 = vmatprep.subr.bf16.mxu0 0
      %598 = vmatpush1.bf16.msra.mxu0 %v540
      %599 = vmatprep.subr.bf16.mxu0 0
      %600 = vmatpush1.bf16.msra.mxu0 %v541
      %601 = vmatprep.subr.bf16.mxu0 0
      %602 = vmatpush1.bf16.msra.mxu0 %v542
      %603 = vmatprep.subr.bf16.mxu0 0
      %604 = vmatpush1.bf16.msra.mxu0 %v543
      %605 = vmatprep.subr.bf16.mxu0 0
      %606 = vmatpush1.bf16.msra.mxu0 %v544
      %607 = vmatprep.subr.bf16.mxu0 0
      %608 = vmatpush1.bf16.msra.mxu0 %v545
      %609 = vmatprep.subr.bf16.mxu0 0
      %610 = vmatpush1.bf16.msra.mxu0 %v546
      %611 = vmatprep.mubr.bf16.mxu0 %v378
      %612 = vmatmul.mubr.bf16.gmra.mrb[0].mxu0 %v377
      %v613 = vpop.f32.mrb[0].mxu0
      %v614 = vadd.f32 %v433, %v613
      %v615 = vpop.f32.mrb[0].mxu0
      %v616 = vpop.f32.mrb[0].mxu0
      %v617 = vpop.f32.mrb[0].mxu0
      %618 = vdwg.mxu0
      %619 = vmatprep.subr.bf16.mxu0 0
      %620 = vmatpush1.bf16.msra.mxu0 %v547
      %621 = vmatprep.subr.bf16.mxu0 0
      %622 = vmatpush1.bf16.msra.mxu0 %v548
      %623 = vmatprep.subr.bf16.mxu0 0
      %624 = vmatpush1.bf16.msra.mxu0 %v549
      %625 = vmatprep.subr.bf16.mxu0 0
      %626 = vmatpush1.bf16.msra.mxu0 %v550
      %627 = vmatprep.subr.bf16.mxu0 0
      %628 = vmatpush1.bf16.msra.mxu0 %v551
      %629 = vmatprep.subr.bf16.mxu0 0
      %630 = vmatpush1.bf16.msra.mxu0 %v552
      %631 = vmatprep.subr.bf16.mxu0 0
      %632 = vmatpush1.bf16.msra.mxu0 %v553
      %633 = vmatprep.subr.bf16.mxu0 0
      %634 = vmatpush1.bf16.msra.mxu0 %v554
      %635 = vmatprep.subr.bf16.mxu0 0
      %636 = vmatpush1.bf16.msra.mxu0 0
      %637 = vmatprep.subr.bf16.mxu0 0
      %638 = vmatpush1.bf16.msra.mxu0 0
      %639 = vmatprep.subr.bf16.mxu0 0
      %640 = vmatpush1.bf16.msra.mxu0 0
      %641 = vmatprep.subr.bf16.mxu0 0
      %642 = vmatpush1.bf16.msra.mxu0 0
      %643 = vmatprep.subr.bf16.mxu0 0
      %644 = vmatpush1.bf16.msra.mxu0 0
      %645 = vmatprep.subr.bf16.mxu0 0
      %646 = vmatpush1.bf16.msra.mxu0 0
      %647 = vmatprep.subr.bf16.mxu0 0
      %648 = vmatpush1.bf16.msra.mxu0 0
      %649 = vmatprep.subr.bf16.mxu0 0
      %650 = vmatpush1.bf16.msra.mxu0 0
      %651 = vmatprep.mubr.bf16.mxu0 0
      %652 = vmatmul.mubr.bf16.gmra.mrb[0].mxu0 %v379
      %v653 = vpop.f32.mrb[0].mxu0
      %v654 = vadd.f32 %v614, %v653
      %v655 = vpop.f32.mrb[0].mxu0
      %v656 = vpop.f32.mrb[0].mxu0
      %v657 = vpop.f32.mrb[0].mxu0
      %658 = vdwg.mxu0
      %vm659 = vcmp.gt.f32.partialorder %v654, 0.0
      %v660 = vmul.f32 %v654, 0.1
      %v661 = vsel %vm659, %v654, %v660
      %662 = vst [vmem:[%s222] sm:$0xff] %v661
      %p663 = scmp.lt.s32.totalorder %s16, 1
      %s664 = scalar_select %p663, %s16, 1
      %s665 = smul.addr %s664, 8
      %s666 = scalar_lea.vmem %s5, %s665
      // Predicated region
      $region41: #{down_forward.1} parent=39 // pred_check
        %p667 = pneg %p144
      $region42: #{down_forward.1} parent=39 // pred_check_branch
        %669 = sbr.rel (%p667) target = $region44
      $region43: #{down_forward.1} parent=39 // pred_region
        _
      $region44: #{down_forward.1} parent=39 // pred_fallthru
        _
    $region40: #{down_forward.1} parent=5 // pred_fallthru
      _
    %p670 = scmp.le.s32.totalorder 2, %s11
    // Predicated region
    $region45: #{down_forward.1} parent=5 // pred_check
      %p671 = pneg %p670
    $region46: #{down_forward.1} parent=5 // pred_check_branch
      %673 = sbr.rel (%p671) target = $region48
    $region47: #{down_forward.1} parent=5 // pred_region
      %s674 = ssub.s32 %s11, 2
      // Predicated region
      $region49: #{down_forward.1} parent=47 // pred_check
        %p675 = pneg %p150
      $region50: #{down_forward.1} parent=47 // pred_check_branch
        %677 = sbr.rel (%p675) target = $region52
      $region51: #{down_forward.1} parent=47 // pred_region
        %p678 = scmp.lt.s32.totalorder %s17, 1
        %s679 = scalar_select %p678, %s17, 1
        %s680 = smul.addr %s679, 8
        %s681 = scalar_lea.vmem %s5, %s680
      $region52: #{down_forward.1} parent=47 // pred_fallthru
        _
    $region48: #{down_forward.1} parent=5 // pred_fallthru
      _
  $region6: #{down_forward.1} parent=0 // loop_footer
    %s15 = sadd.s32 1, %s11
  $region7: #{down_forward.1} parent=0 // loop_footer_branch
    %10 = sbr.rel target = $region3
  $region8: #{down_forward.1} parent=0 // loop_exit
    _

</llo_original>
